<compile_context>
chip_gen: v6e
topology: v6e:2x2x1
jax: 0.10.0
libtpu: 0.0.40
codegen_flags: <defaults>
</compile_context>

<pallas_src>
import jax
import jax.numpy as jnp
from jax.experimental import pallas as pl
from jax.experimental.pallas import tpu as pltpu

LANE = 128
SUBLANE = 8


def _round_up(x, m):
    return (x + m - 1) // m * m


def l1gate_mlp_kernel(x_ref, w1_ref, b1_ref, w2_ref, b2_ref, o_ref):
    # Gate already folded into W1 (W1' = diag(mu) @ W1) in the wrapper.
    h = jnp.dot(x_ref[...], w1_ref[...], preferred_element_type=jnp.float32)
    h = jnp.maximum(h + b1_ref[...], 0.0)
    # Dropout(0.2) layers are identity in eval mode.
    o_ref[...] = (
        jnp.dot(h.astype(w2_ref.dtype), w2_ref[...], preferred_element_type=jnp.float32)
        + b2_ref[...]
    ).astype(o_ref.dtype)


def l1gate_regression_forward(x, mu, w1, b1, w2, b2, *, tile_b=512):
    """Eval-mode forward of L1GateRegressionModel.

    x:  [B, D_in]
    mu: [D_in]                  (GatingLayer.mu)
    w1: [D_in, H],  b1: [H]     (hidden LinearLayer weights, already transposed)
    w2: [H, D_out], b2: [D_out] (final nn.Linear, already transposed)
    """
    B, D_in = x.shape
    H = w1.shape[1]
    D_out = w2.shape[1]

    # --- Algebraic fold of the gate into the first weight matrix. ---
    w1_folded = jnp.reshape(mu, (D_in, 1)).astype(jnp.float32) * w1.astype(jnp.float32)

    # --- Lane-dense output: pad final layer to a multiple of 128 lanes. ---
    d_out_p = _round_up(D_out, LANE)
    w2_p = jnp.zeros((H, d_out_p), jnp.float32).at[:, :D_out].set(w2.astype(jnp.float32))
    b2_p = jnp.zeros((1, d_out_p), jnp.float32).at[:, :D_out].set(
        jnp.reshape(b2, (1, D_out)).astype(jnp.float32)
    )

    # --- bf16 streaming inputs; MXU accumulates in f32. ---
    x_bf16 = x.astype(jnp.bfloat16)
    w1_bf16 = w1_folded.astype(jnp.bfloat16)
    w2_bf16 = w2_p.astype(jnp.bfloat16)
    b1_f32 = jnp.reshape(b1, (1, H)).astype(jnp.float32)

    # --- Batch tiling: multiple of 8 sublanes, up to tile_b rows per grid step. ---
    tb = _round_up(min(tile_b, _round_up(B, SUBLANE)), SUBLANE)
    b_pad = _round_up(B, tb)
    if b_pad != B:
        x_bf16 = jnp.pad(x_bf16, ((0, b_pad - B), (0, 0)))
    num_tiles = b_pad // tb

    cost = pl.CostEstimate(
        flops=2 * b_pad * (D_in * H + H * d_out_p),
        transcendentals=0,
        bytes_accessed=(
            2 * b_pad * D_in          # x (bf16)
            + 2 * D_in * H            # W1' (bf16)
            + 2 * H * d_out_p         # W2 (bf16, padded)
            + 4 * H + 4 * d_out_p     # biases (f32)
            + 4 * b_pad * d_out_p     # output (f32)
        ),
    )

    out = pl.pallas_call(
        l1gate_mlp_kernel,
        out_shape=jax.ShapeDtypeStruct((b_pad, d_out_p), jnp.float32),
        grid=(num_tiles,),
        in_specs=[
            pl.BlockSpec((tb, D_in), lambda i: (i, 0)),     # x  (streamed per batch tile)
            pl.BlockSpec((D_in, H), lambda i: (0, 0)),      # W1' (resident in VMEM)
            pl.BlockSpec((1, H), lambda i: (0, 0)),         # b1
            pl.BlockSpec((H, d_out_p), lambda i: (0, 0)),   # W2 (padded, resident)
            pl.BlockSpec((1, d_out_p), lambda i: (0, 0)),   # b2 (padded)
        ],
        out_specs=pl.BlockSpec((tb, d_out_p), lambda i: (i, 0)),
        compiler_params=pltpu.CompilerParams(
            dimension_semantics=("parallel",),   # v7x: shard batch tiles over 2 TCs
        ),
        cost_estimate=cost,
    )(x_bf16, w1_bf16, b1_f32, w2_bf16, b2_p)

    # Strip batch padding and the lane padding of the output.
    return out[:B, :D_out]


if __name__ == "__main__":
    # Small shapes consistent with the module: input_dim=32, hidden_dims=[32], output_dim=8.
    B, D_in, H, D_out = 8, 32, 32, 8

    key = jax.random.PRNGKey(0)
    kx, kmu, kw1, kb1, kw2, kb2 = jax.random.split(key, 6)

    x = jax.random.normal(kx, (B, D_in), dtype=jnp.float32)
    mu = 0.01 * jax.random.normal(kmu, (D_in,), dtype=jnp.float32)   # GatingLayer.mu

    bound1 = 1.0 / (D_in ** 0.5)
    w1 = jax.random.uniform(kw1, (D_in, H), jnp.float32, -bound1, bound1)
    b1 = jax.random.uniform(kb1, (H,), jnp.float32, -bound1, bound1)
    bound2 = 1.0 / (H ** 0.5)
    w2 = jax.random.uniform(kw2, (H, D_out), jnp.float32, -bound2, bound2)
    b2 = jax.random.uniform(kb2, (D_out,), jnp.float32, -bound2, bound2)

    pred = l1gate_regression_forward(x, mu, w1, b1, w2, b2)
    pred = jax.block_until_ready(pred)
    assert pred.shape == (B, D_out)

    # Reference 1: identical numeric path (bf16 inputs, f32 accumulation) -> tight match.
    w1f_bf = (mu[:, None] * w1).astype(jnp.bfloat16)
    h_ref = jnp.maximum(
        jnp.dot(x.astype(jnp.bfloat16), w1f_bf, preferred_element_type=jnp.float32) + b1,
        0.0,
    )
    ref_bf16 = (
        jnp.dot(h_ref.astype(jnp.bfloat16), w2.astype(jnp.bfloat16),
                preferred_element_type=jnp.float32)
        + b2
    )
    assert jnp.allclose(pred, ref_bf16, atol=1e-3, rtol=1e-3), float(
        jnp.max(jnp.abs(pred - ref_bf16))
    )

    # Reference 2: full f32 eval-mode forward of the PyTorch module -> loose match
    # (only difference is bf16 rounding of the streamed operands).
    ref_f32 = jnp.maximum((x * mu) @ w1 + b1, 0.0) @ w2 + b2
    assert jnp.allclose(pred, ref_f32, atol=5e-3, rtol=5e-2), float(
        jnp.max(jnp.abs(pred - ref_f32))
    )

    # Exercise the batch grid + padding path (B not a tile multiple, multi-tile grid).
    B2 = 13
    x2 = jax.random.normal(jax.random.PRNGKey(1), (B2, D_in), dtype=jnp.float32)
    pred2 = jax.block_until_ready(
        l1gate_regression_forward(x2, mu, w1, b1, w2, b2, tile_b=8)
    )
    ref2 = jnp.maximum((x2 * mu) @ w1 + b1, 0.0) @ w2 + b2
    assert pred2.shape == (B2, D_out)
    assert jnp.allclose(pred2, ref2, atol=5e-3, rtol=5e-2), float(
        jnp.max(jnp.abs(pred2 - ref2))
    )

    print("KERNEL_OK")
</pallas_src>

<mosaic_0001>
module attributes {stable_mosaic.version = 11 : i64} {
  func.func @l1gate_mlp_kernel(%arg0: i32, %arg1: memref<8x32xbf16, #tpu.memory_space<vmem>>, %arg2: memref<32x32xbf16, #tpu.memory_space<vmem>>, %arg3: memref<1x32xf32, #tpu.memory_space<vmem>>, %arg4: memref<32x128xbf16, #tpu.memory_space<vmem>>, %arg5: memref<1x128xf32, #tpu.memory_space<vmem>>, %arg6: memref<8x128xf32, #tpu.memory_space<vmem>>) attributes {dimension_semantics = [#tpu.dimension_semantics<parallel>], iteration_bounds = array<i64: 1>, scalar_prefetch = 0 : i64, scratch_operands = 0 : i64, tpu.core_type = #tpu.core_type<tc>, window_params = [{transform_indices = @transform_0, window_bounds = array<i64: 8, 32>}, {pipeline_mode = #tpu.pipeline_mode<synchronous>, transform_indices = @transform_1, window_bounds = array<i64: 32, 32>}, {pipeline_mode = #tpu.pipeline_mode<synchronous>, transform_indices = @transform_2, window_bounds = array<i64: 1, 32>}, {pipeline_mode = #tpu.pipeline_mode<synchronous>, transform_indices = @transform_3, window_bounds = array<i64: 32, 128>}, {pipeline_mode = #tpu.pipeline_mode<synchronous>, transform_indices = @transform_4, window_bounds = array<i64: 1, 128>}, {transform_indices = @transform_5, window_bounds = array<i64: 8, 128>}]} {
    %c0 = arith.constant 0 : index
    %c0_0 = arith.constant 0 : index
    %0 = vector.load %arg1[%c0, %c0_0] : memref<8x32xbf16, #tpu.memory_space<vmem>>, vector<8x32xbf16>
    %c0_1 = arith.constant 0 : index
    %c0_2 = arith.constant 0 : index
    %1 = vector.load %arg2[%c0_1, %c0_2] : memref<32x32xbf16, #tpu.memory_space<vmem>>, vector<32x32xbf16>
    %cst = arith.constant dense<0.000000e+00> : vector<8x32xf32>
    %2 = tpu.matmul %0, %1, %cst {dimension_numbers = #tpu.dot_dimension_numbers<[1], [0], [0], [1], [0, 0, 1, 1], [], []>} : vector<8x32xbf16>, vector<32x32xbf16>, vector<8x32xf32> -> vector<8x32xf32>
    %c0_3 = arith.constant 0 : index
    %c0_4 = arith.constant 0 : index
    %3 = vector.load %arg3[%c0_3, %c0_4] : memref<1x32xf32, #tpu.memory_space<vmem>>, vector<1x32xf32>
    %4 = vector.broadcast %3 : vector<1x32xf32> to vector<8x32xf32>
    %5 = arith.addf %2, %4 : vector<8x32xf32>
    %cst_5 = arith.constant 0.000000e+00 : f32
    %6 = vector.broadcast %cst_5 : f32 to vector<8x32xf32>
    %7 = arith.maximumf %5, %6 : vector<8x32xf32>
    %8 = arith.truncf %7 : vector<8x32xf32> to vector<8x32xbf16>
    %c0_6 = arith.constant 0 : index
    %c0_7 = arith.constant 0 : index
    %9 = vector.load %arg4[%c0_6, %c0_7] : memref<32x128xbf16, #tpu.memory_space<vmem>>, vector<32x128xbf16>
    %cst_8 = arith.constant dense<0.000000e+00> : vector<8x128xf32>
    %10 = tpu.matmul %8, %9, %cst_8 {dimension_numbers = #tpu.dot_dimension_numbers<[1], [0], [0], [1], [0, 0, 1, 1], [], []>} : vector<8x32xbf16>, vector<32x128xbf16>, vector<8x128xf32> -> vector<8x128xf32>
    %c0_9 = arith.constant 0 : index
    %c0_10 = arith.constant 0 : index
    %11 = vector.load %arg5[%c0_9, %c0_10] : memref<1x128xf32, #tpu.memory_space<vmem>>, vector<1x128xf32>
    %12 = vector.broadcast %11 : vector<1x128xf32> to vector<8x128xf32>
    %13 = arith.addf %10, %12 : vector<8x128xf32>
    %c0_11 = arith.constant 0 : index
    %c0_12 = arith.constant 0 : index
    %14 = vector.load %arg6[%c0_11, %c0_12] : memref<8x128xf32, #tpu.memory_space<vmem>>, vector<8x128xf32>
    tpu.vector_store %arg6[%c0_11, %c0_12], %13 {strides = array<i32>} : memref<8x128xf32, #tpu.memory_space<vmem>>, vector<8x128xf32>,
    return
  }
  func.func @transform_0(%arg0: i32) -> (i32, i32) {
    %c0_i32 = arith.constant 0 : i32
    %c0_i32_0 = arith.constant 0 : i32
    return %arg0, %c0_i32 : i32, i32
  }
  func.func @transform_1(%arg0: i32) -> (i32, i32) {
    %c0_i32 = arith.constant 0 : i32
    %c0_i32_0 = arith.constant 0 : i32
    %c0_i32_1 = arith.constant 0 : i32
    return %c0_i32, %c0_i32_0 : i32, i32
  }
  func.func @transform_2(%arg0: i32) -> (i32, i32) {
    %c0_i32 = arith.constant 0 : i32
    %c0_i32_0 = arith.constant 0 : i32
    %c0_i32_1 = arith.constant 0 : i32
    return %c0_i32, %c0_i32_0 : i32, i32
  }
  func.func @transform_3(%arg0: i32) -> (i32, i32) {
    %c0_i32 = arith.constant 0 : i32
    %c0_i32_0 = arith.constant 0 : i32
    %c0_i32_1 = arith.constant 0 : i32
    return %c0_i32, %c0_i32_0 : i32, i32
  }
  func.func @transform_4(%arg0: i32) -> (i32, i32) {
    %c0_i32 = arith.constant 0 : i32
    %c0_i32_0 = arith.constant 0 : i32
    %c0_i32_1 = arith.constant 0 : i32
    return %c0_i32, %c0_i32_0 : i32, i32
  }
  func.func @transform_5(%arg0: i32) -> (i32, i32) {
    %c0_i32 = arith.constant 0 : i32
    %c0_i32_0 = arith.constant 0 : i32
    return %arg0, %c0_i32 : i32, i32
  }
}

</mosaic_0001>

<llo_original>
// kernel: tpu_custom_call.1
$region0: #{tpu_custom_call.1}
  #allocation0 [shape = 'u32[]', space=smem, size = 0x4, offset = 0x4, fixed_abs, tag = 'smem constant byte address 0x4 - core index']
  #allocation1 [shape = 'u32[144,128]{1,0:T(1,128)}', space=vmem, size = 0x12000, scoped, tag = 'internal scratch']
  %s0 = inlined_call_operand.hbm [shape: bf16[8,32], index: 0, kind: input, shape index: {}]
  %s1 = inlined_call_operand.hbm [shape: bf16[32,32], index: 1, kind: input, shape index: {}]
  %s2 = inlined_call_operand.vmem [shape: f32[1,32], index: 2, kind: input, shape index: {}]
  %s3 = inlined_call_operand.hbm [shape: bf16[32,128], index: 3, kind: input, shape index: {}]
  %s4 = inlined_call_operand.vmem [shape: f32[1,128], index: 4, kind: input, shape index: {}]
  %s5 = inlined_call_operand.hbm [shape: f32[8,128], index: 5, kind: output, shape index: {}]
  %s6 = sld [smem:[#allocation0]]
  $region42: #{tpu_custom_call.1} parent=0
    _
  %s8 = ssub.s32 1, %s6
  %s9 = scalar_select 0, %s8, %s6
  $region1: #{tpu_custom_call.1} parent=0
    #allocation2 [shape = 'u8[2048]{0}', space=vmem, size = 0x800, scoped, tag = 'input window, operand 0, single buffered']
    #allocation3 [shape = 's32[1]{0}', space=sflag, size = 0x4, scoped, tag = 'scoped memory for tpu_custom_call.1']
    #allocation4 [shape = 's32[1]{0}', space=sflag, size = 0x4, scoped, tag = 'scoped memory for tpu_custom_call.1']
    #allocation5 [shape = 'u8[8192]{0}', space=vmem, size = 0x2000, scoped, tag = 'input window, operand 1, single buffered']
    #allocation6 [shape = 's32[1]{0}', space=sflag, size = 0x4, scoped, tag = 'scoped memory for tpu_custom_call.1']
    #allocation7 [shape = 'u8[8192]{0}', space=vmem, size = 0x2000, scoped, tag = 'input window, operand 3, single buffered']
    #allocation8 [shape = 'u8[4096]{0}', space=vmem, size = 0x1000, scoped, tag = 'output window, operand 0, single buffered']
    %10 = vsyncpa [#allocation3], 0
    %11 = vsyncpa [#allocation6], 0
    %12 = vsyncpa [#allocation4], 0
    // Predicated region
    $region2: #{tpu_custom_call.1} parent=1 // pred_check
      _
    $region3: #{tpu_custom_call.1} parent=1 // pred_check_branch
      %14 = sbr.rel (0) target = $region5
    $region4: #{tpu_custom_call.1} parent=1 // pred_region
      %s16 = ssub.s32 64, 64
      %17 = vsyncadd [#allocation3], %s16
      %s19 = sshll.u32 [#allocation2], 4
      %s20 = int_to_ptr.vmem [resolvable:$true] %s19
      %22 = dma.hbm_to_vmem [thread:$0]  %s0, 64, %s20, [#allocation3]
    $region5: #{tpu_custom_call.1} parent=1 // pred_fallthru
      _
    // Predicated region
    $region6: #{tpu_custom_call.1} parent=1 // pred_check
      _
    $region7: #{tpu_custom_call.1} parent=1 // pred_check_branch
      %24 = sbr.rel (0) target = $region9
    $region8: #{tpu_custom_call.1} parent=1 // pred_region
      %s26 = ssub.s32 256, 256
      %27 = vsyncadd [#allocation6], %s26
      %s28 = sshll.u32 [#allocation5], 4
      %s29 = int_to_ptr.vmem [resolvable:$true] %s28
      %34 = dma.hbm_to_vmem [thread:$0]  %s1, 256, %s29, [#allocation6], 64, 64, 4
    $region9: #{tpu_custom_call.1} parent=1 // pred_fallthru
      _
    // Predicated region
    $region10: #{tpu_custom_call.1} parent=1 // pred_check
      _
    $region11: #{tpu_custom_call.1} parent=1 // pred_check_branch
      %36 = sbr.rel (0) target = $region13
    $region12: #{tpu_custom_call.1} parent=1 // pred_region
      _
    $region13: #{tpu_custom_call.1} parent=1 // pred_fallthru
      _
    // Predicated region
    $region14: #{tpu_custom_call.1} parent=1 // pred_check
      _
    $region15: #{tpu_custom_call.1} parent=1 // pred_check_branch
      %38 = sbr.rel (0) target = $region17
    $region16: #{tpu_custom_call.1} parent=1 // pred_region
      %s40 = ssub.s32 256, 256
      %41 = vsyncadd [#allocation6], %s40
      %s42 = sshll.u32 [#allocation7], 4
      %s43 = int_to_ptr.vmem [resolvable:$true] %s42
      %48 = dma.hbm_to_vmem [thread:$0]  %s3, 256, %s43, [#allocation6], 64, 64, 4
    $region17: #{tpu_custom_call.1} parent=1 // pred_fallthru
      _
    // Predicated region
    $region18: #{tpu_custom_call.1} parent=1 // pred_check
      _
    $region19: #{tpu_custom_call.1} parent=1 // pred_check_branch
      %50 = sbr.rel (0) target = $region21
    $region20: #{tpu_custom_call.1} parent=1 // pred_region
      _
    $region21: #{tpu_custom_call.1} parent=1 // pred_fallthru
      _
    // Predicated region
    $region22: #{tpu_custom_call.1} parent=1 // pred_check
      _
    $region23: #{tpu_custom_call.1} parent=1 // pred_check_branch
      %52 = sbr.rel (0) target = $region25
    $region24: #{tpu_custom_call.1} parent=1 // pred_region
      %53 = dma.done [#allocation3], 64
    $region25: #{tpu_custom_call.1} parent=1 // pred_fallthru
      _
    // Predicated region
    $region26: #{tpu_custom_call.1} parent=1 // pred_check
      _
    $region27: #{tpu_custom_call.1} parent=1 // pred_check_branch
      %55 = sbr.rel (0) target = $region29
    $region28: #{tpu_custom_call.1} parent=1 // pred_region
      %56 = dma.done [#allocation6], 256
    $region29: #{tpu_custom_call.1} parent=1 // pred_fallthru
      _
    // Predicated region
    $region30: #{tpu_custom_call.1} parent=1 // pred_check
      _
    $region31: #{tpu_custom_call.1} parent=1 // pred_check_branch
      %58 = sbr.rel (0) target = $region33
    $region32: #{tpu_custom_call.1} parent=1 // pred_region
      %59 = dma.done [#allocation6], 256
    $region33: #{tpu_custom_call.1} parent=1 // pred_fallthru
      _
    %v61 = vld [vmem:[#allocation2] sm:$0xf]
    %v62 = vld [vmem:[#allocation5] sm:$0xf]
    %v63 = vld [vmem:[#allocation5 + $0x4] sm:$0xf]
    %v64 = vld [vmem:[#allocation5 + $0x8] sm:$0xf]
    %v65 = vld [vmem:[#allocation5 + $0xc] sm:$0xf]
    %v66 = vld [vmem:[%s2] sm:$0x1]
    %v68 = vlaneseq
    %v69 = vshrl.u32 %v68, 7
    %v70 = vsub.s32 0, %v69
    %v71 = vrot.slane %v66, %v70
    %v77 = vunpack.c.l.b16 %v62
    %v78 = vunpack.c.l.b16 %v63
    %v79 = vunpack.c.l.b16 %v64
    %v80 = vunpack.c.l.b16 %v65
    %v81 = vpack.c.b16 %v78, %v77
    %v82 = vpack.c.b16 %v80, %v79
    %vm85 = vcmask 261120
    %v87 = vsel %vm85, %v61, 0
    %89 = vmatprep.subr.bf16.mxu0 0
    %90 = vmatpush1.bf16.msra.mxu0 0
    %91 = vmatprep.subr.bf16.mxu0 0
    %92 = vmatpush1.bf16.msra.mxu0 0
    %93 = vmatprep.subr.bf16.mxu0 0
    %94 = vmatpush1.bf16.msra.mxu0 0
    %95 = vmatprep.subr.bf16.mxu0 0
    %96 = vmatpush1.bf16.msra.mxu0 0
    %97 = vmatprep.subr.bf16.mxu0 0
    %98 = vmatpush1.bf16.msra.mxu0 0
    %99 = vmatprep.subr.bf16.mxu0 0
    %100 = vmatpush1.bf16.msra.mxu0 0
    %101 = vmatprep.subr.bf16.mxu0 0
    %102 = vmatpush1.bf16.msra.mxu0 %v82
    %103 = vmatprep.subr.bf16.mxu0 0
    %104 = vmatpush1.bf16.msra.mxu0 %v81
    %105 = vmatprep.subr.bf16.mxu0 0
    %106 = vmatpush2.bf16.msra.mxu0 0
    %107 = vmatprep.subr.bf16.mxu0 0
    %108 = vmatpush2.bf16.msra.mxu0 0
    %109 = vmatprep.subr.bf16.mxu0 0
    %110 = vmatpush2.bf16.msra.mxu0 0
    %111 = vmatprep.subr.bf16.mxu0 0
    %112 = vmatpush2.bf16.msra.mxu0 0
    %113 = vmatprep.subr.bf16.mxu0 0
    %114 = vmatpush2.bf16.msra.mxu0 0
    %115 = vmatprep.subr.bf16.mxu0 0
    %116 = vmatpush2.bf16.msra.mxu0 0
    %117 = vmatprep.subr.bf16.mxu0 0
    %118 = vmatpush2.bf16.msra.mxu0 0
    %119 = vmatprep.subr.bf16.mxu0 0
    %120 = vmatpush2.bf16.msra.mxu0 0
    %121 = vmatprep.mubr.bf16.mxu0 0
    %122 = vmatmul.mubr.bf16.gmra.mxu0 %v87
    %v123 = vpop.f32.mrf.mxu0
    %v124 = vadd.f32 %v71, %v123
    %v125 = vpop.f32.mrf.mxu0
    %v126 = vpop.f32.mrf.mxu0
    %v127 = vpop.f32.mrf.mxu0
    %128 = vdwg.mxu0
    %v129 = vmax.f32 %v124, 0.0
    %v130 = vpack.c.bf16 %v129, %v129
    %v131 = vld [vmem:[#allocation7] sm:$0xf]
    %v132 = vld [vmem:[#allocation7 + $0x4] sm:$0xf]
    %v133 = vld [vmem:[#allocation7 + $0x8] sm:$0xf]
    %v134 = vld [vmem:[#allocation7 + $0xc] sm:$0xf]
    %v135 = vld [vmem:[%s4] sm:$0x1]
    %v137 = vlaneseq
    %v138 = vshrl.u32 %v137, 7
    %v139 = vsub.s32 0, %v138
    %v140 = vrot.slane %v135, %v139
    %v146 = vunpack.c.l.b16 %v131
    %v147 = vunpack.c.l.b16 %v132
    %v148 = vunpack.c.l.b16 %v133
    %v149 = vunpack.c.l.b16 %v134
    %v150 = vpack.c.b16 %v147, %v146
    %v151 = vpack.c.b16 %v149, %v148
    %v155 = vsel %vm85, %v130, 0
    %157 = vmatprep.subr.bf16.mxu0 0
    %158 = vmatpush1.bf16.msra.mxu0 0
    %159 = vmatprep.subr.bf16.mxu0 0
    %160 = vmatpush1.bf16.msra.mxu0 0
    %161 = vmatprep.subr.bf16.mxu0 0
    %162 = vmatpush1.bf16.msra.mxu0 0
    %163 = vmatprep.subr.bf16.mxu0 0
    %164 = vmatpush1.bf16.msra.mxu0 0
    %165 = vmatprep.subr.bf16.mxu0 0
    %166 = vmatpush1.bf16.msra.mxu0 0
    %167 = vmatprep.subr.bf16.mxu0 0
    %168 = vmatpush1.bf16.msra.mxu0 0
    %169 = vmatprep.subr.bf16.mxu0 0
    %170 = vmatpush1.bf16.msra.mxu0 %v151
    %171 = vmatprep.subr.bf16.mxu0 0
    %172 = vmatpush1.bf16.msra.mxu0 %v150
    %173 = vmatprep.subr.bf16.mxu0 0
    %174 = vmatpush2.bf16.msra.mxu0 0
    %175 = vmatprep.subr.bf16.mxu0 0
    %176 = vmatpush2.bf16.msra.mxu0 0
    %177 = vmatprep.subr.bf16.mxu0 0
    %178 = vmatpush2.bf16.msra.mxu0 0
    %179 = vmatprep.subr.bf16.mxu0 0
    %180 = vmatpush2.bf16.msra.mxu0 0
    %181 = vmatprep.subr.bf16.mxu0 0
    %182 = vmatpush2.bf16.msra.mxu0 0
    %183 = vmatprep.subr.bf16.mxu0 0
    %184 = vmatpush2.bf16.msra.mxu0 0
    %185 = vmatprep.subr.bf16.mxu0 0
    %186 = vmatpush2.bf16.msra.mxu0 0
    %187 = vmatprep.subr.bf16.mxu0 0
    %188 = vmatpush2.bf16.msra.mxu0 0
    %189 = vmatprep.mubr.bf16.mxu0 0
    %190 = vmatmul.mubr.bf16.gmra.mxu0 %v155
    %v191 = vpop.f32.mrf.mxu0
    %v192 = vadd.f32 %v140, %v191
    %v193 = vpop.f32.mrf.mxu0
    %v194 = vpop.f32.mrf.mxu0
    %v195 = vpop.f32.mrf.mxu0
    %196 = vdwg.mxu0
    %197 = vst [vmem:[#allocation8] sm:$0xff] %v192
    // Predicated region
    $region34: #{tpu_custom_call.1} parent=1 // pred_check
      _
    $region35: #{tpu_custom_call.1} parent=1 // pred_check_branch
      %199 = sbr.rel (0) target = $region37
    $region36: #{tpu_custom_call.1} parent=1 // pred_region
      %s201 = ssub.s32 128, 128
      %202 = vsyncadd [#allocation4], %s201
      %s204 = sshll.u32 [#allocation8], 4
      %s205 = int_to_ptr.vmem [resolvable:$true] %s204
      %207 = dma.vmem_to_hbm [thread:$0]  %s205, 128, %s5, [#allocation4]
    $region37: #{tpu_custom_call.1} parent=1 // pred_fallthru
      _
    // Predicated region
    $region38: #{tpu_custom_call.1} parent=1 // pred_check
      _
    $region39: #{tpu_custom_call.1} parent=1 // pred_check_branch
      %209 = sbr.rel (0) target = $region41
    $region40: #{tpu_custom_call.1} parent=1 // pred_region
      %210 = dma.done [#allocation4], 128
    $region41: #{tpu_custom_call.1} parent=1 // pred_fallthru
      _
    %211 = vsyncpa [#allocation3], 1
    %212 = vsyncpa [#allocation6], 1
    %213 = vsyncpa [#allocation4], 1

</llo_original>
